<compile_context>
chip_gen: v5e
topology: v5e:2x2
jax: 0.10.0
libtpu: 0.0.40
codegen_flags: <defaults>
</compile_context>

<pallas_src>
import math

import jax
import jax.numpy as jnp
from jax.experimental import pallas as pl
from jax.experimental.pallas import tpu as pltpu


def _round_up(v, m):
    return ((v + m - 1) // m) * m


# --------------- Stage 1: support = X2d @ W (single large GEMM) -------------

def _support_kernel(x_ref, w_ref, o_ref):
    # x_ref: (TM_S, Fin), w_ref: (Fin, Fout_pad), o_ref: (TM_S, Fout_pad)
    o_ref[...] = jnp.dot(
        x_ref[...], w_ref[...], preferred_element_type=jnp.float32
    ).astype(o_ref.dtype)


# --------------- Stage 2: out[b] = adj[b] @ support[b] + bias ---------------

def _aggregate_kernel(adj_ref, sup_ref, b_ref, o_ref, acc_ref):
    # adj_ref: (1, TM, TK), sup_ref: (1, TK, Fout_pad), b_ref: (1, Fout_pad)
    # o_ref:   (1, TM, Fout_pad), acc_ref: (TM, Fout_pad) f32 scratch
    k = pl.program_id(2)

    @pl.when(k == 0)
    def _():
        acc_ref[...] = jnp.zeros_like(acc_ref)

    acc_ref[...] += jnp.dot(
        adj_ref[0], sup_ref[0], preferred_element_type=jnp.float32
    )

    @pl.when(k == pl.num_programs(2) - 1)
    def _():
        o_ref[0] = (acc_ref[...] + b_ref[...]).astype(o_ref.dtype)


def graph_conv_layer(x, adj, weight, bias, *, compute_dtype=None):
    """x:[B,N,Fin], adj:[B,N,N], weight:[Fin,Fout], bias:[Fout] -> [B,N,Fout]."""
    B, N, Fin = x.shape
    Fout = weight.shape[1]
    out_dtype = x.dtype
    cdt = jnp.dtype(compute_dtype) if compute_dtype is not None else jnp.dtype(x.dtype)

    # Tile sizes: 128-aligned for small graphs (v5e-friendly), 256 otherwise
    # (matches v6e/v7x 256x256 MXU). Fout padded to a lane-dense 128 multiple.
    tile_n = 256 if N > 128 else 128
    N_pad = _round_up(N, tile_n)
    Fout_pad = _round_up(Fout, 128)

    # Pad (zeros are mathematically inert here) and cast operands.
    xp = jnp.pad(x, ((0, 0), (0, N_pad - N), (0, 0))).astype(cdt)
    adjp = jnp.pad(adj, ((0, 0), (0, N_pad - N), (0, N_pad - N))).astype(cdt)
    wp = jnp.pad(weight, ((0, 0), (0, Fout_pad - Fout))).astype(cdt)
    bp = jnp.pad(bias, (0, Fout_pad - Fout)).reshape(1, Fout_pad).astype(jnp.float32)

    # ---------------- Stage 1: one big GEMM over B*N_pad rows ----------------
    M = B * N_pad
    x2d = xp.reshape(M, Fin)
    tm_s = 256 if M % 256 == 0 else 128
    sup_dtype = cdt
    itm = jnp.dtype(cdt).itemsize
    cost1 = pl.CostEstimate(
        flops=2 * M * Fin * Fout_pad,
        transcendentals=0,
        bytes_accessed=(M * Fin * itm + Fin * Fout_pad * itm
                        + M * Fout_pad * jnp.dtype(sup_dtype).itemsize),
    )
    support = pl.pallas_call(
        _support_kernel,
        out_shape=jax.ShapeDtypeStruct((M, Fout_pad), sup_dtype),
        grid_spec=pltpu.PrefetchScalarGridSpec(
            num_scalar_prefetch=0,
            grid=(M // tm_s,),
            in_specs=[
                pl.BlockSpec((tm_s, Fin), lambda i: (i, 0)),
                pl.BlockSpec((Fin, Fout_pad), lambda i: (0, 0)),  # W resident
            ],
            out_specs=pl.BlockSpec((tm_s, Fout_pad), lambda i: (i, 0)),
        ),
        compiler_params=pltpu.CompilerParams(dimension_semantics=("parallel",)),
        cost_estimate=cost1,
    )(x2d, wp)
    support = support.reshape(B, N_pad, Fout_pad)

    # ---------------- Stage 2: tiled adj @ support + bias --------------------
    tm = tk = tile_n
    cost2 = pl.CostEstimate(
        flops=2 * B * N_pad * N_pad * Fout_pad,
        transcendentals=0,
        bytes_accessed=(B * N_pad * N_pad * jnp.dtype(cdt).itemsize
                        + B * N_pad * Fout_pad * jnp.dtype(sup_dtype).itemsize
                        + Fout_pad * 4
                        + B * N_pad * Fout_pad * jnp.dtype(out_dtype).itemsize),
    )
    out = pl.pallas_call(
        _aggregate_kernel,
        out_shape=jax.ShapeDtypeStruct((B, N_pad, Fout_pad), out_dtype),
        grid_spec=pltpu.PrefetchScalarGridSpec(
            num_scalar_prefetch=0,
            grid=(B, N_pad // tm, N_pad // tk),
            in_specs=[
                pl.BlockSpec((1, tm, tk), lambda b, i, k: (b, i, k)),
                pl.BlockSpec((1, tk, Fout_pad), lambda b, i, k: (b, k, 0)),
                pl.BlockSpec((1, Fout_pad), lambda b, i, k: (0, 0)),
            ],
            out_specs=pl.BlockSpec((1, tm, Fout_pad), lambda b, i, k: (b, i, 0)),
            scratch_shapes=[pltpu.VMEM((tm, Fout_pad), jnp.float32)],
        ),
        compiler_params=pltpu.CompilerParams(
            dimension_semantics=("parallel", "parallel", "arbitrary"),
        ),
        cost_estimate=cost2,
    )(adjp, support, bp)

    return out[:, :N, :Fout]


def init_params(key, in_features, out_features):
    """kaiming_uniform-style init matching PyTorch defaults; bias zeros."""
    # PyTorch kaiming_uniform_ (a=0): bound = sqrt(2) * sqrt(3 / fan_in),
    # where fan_in for a [in, out] 2D tensor is dim 1 (= out_features).
    fan_in = out_features
    bound = math.sqrt(2.0) * math.sqrt(3.0 / fan_in)
    weight = jax.random.uniform(
        key, (in_features, out_features), jnp.float32, -bound, bound
    )
    bias = jnp.zeros((out_features,), jnp.float32)
    return weight, bias


def reference(x, adj, weight, bias):
    support = jnp.einsum("bni,io->bno", x, weight,
                         precision=jax.lax.Precision.HIGHEST)
    return jnp.einsum("bnm,bmo->bno", adj, support,
                      precision=jax.lax.Precision.HIGHEST) + bias


if __name__ == "__main__":
    key = jax.random.PRNGKey(0)

    # ---- Case 1: small shapes matching the module's typical use -------------
    B, N, Fin, Fout = 2, 16, 32, 32
    kx, kadj, kw, k2 = jax.random.split(key, 4)
    x = jax.random.normal(kx, (B, N, Fin), jnp.float32)
    adj = jax.random.uniform(kadj, (B, N, N), jnp.float32)
    weight, bias = init_params(kw, Fin, Fout)

    out = jax.block_until_ready(graph_conv_layer(x, adj, weight, bias))
    ref = reference(x, adj, weight, bias)
    assert out.shape == (B, N, Fout)
    assert jnp.allclose(out, ref, atol=1e-4, rtol=1e-4)

    # bf16 operand path (v6e/v7x MXU-friendly), f32 accumulation -- loose check.
    out_bf16 = jax.block_until_ready(
        graph_conv_layer(x, adj, weight, bias, compute_dtype=jnp.bfloat16)
    )
    assert out_bf16.shape == (B, N, Fout)
    assert float(jnp.max(jnp.abs(out_bf16 - ref))) < 0.5

    # ---- Case 2: non-aligned shapes exercising the tiled/padded path --------
    B2, N2, Fin2, Fout2 = 2, 300, 48, 72
    kx2, kadj2, kw2 = jax.random.split(k2, 3)
    x2 = jax.random.normal(kx2, (B2, N2, Fin2), jnp.float32)
    adj2 = jax.random.uniform(kadj2, (B2, N2, N2), jnp.float32)
    w2, b2 = init_params(kw2, Fin2, Fout2)

    out2 = jax.block_until_ready(graph_conv_layer(x2, adj2, w2, b2))
    ref2 = reference(x2, adj2, w2, b2)
    assert out2.shape == (B2, N2, Fout2)
    assert jnp.allclose(out2, ref2, atol=2e-3, rtol=2e-3)

    print("KERNEL_OK")
</pallas_src>

<mosaic_0001>
module attributes {stable_mosaic.version = 11 : i64} {
  func.func @_support_kernel(%arg0: i32, %arg1: memref<256x32xf32, #tpu.memory_space<vmem>>, %arg2: memref<32x128xf32, #tpu.memory_space<vmem>>, %arg3: memref<256x128xf32, #tpu.memory_space<vmem>>) attributes {dimension_semantics = [#tpu.dimension_semantics<parallel>], iteration_bounds = array<i64: 1>, scalar_prefetch = 0 : i64, scratch_operands = 0 : i64, tpu.core_type = #tpu.core_type<tc>, window_params = [{transform_indices = @transform_0, window_bounds = array<i64: 256, 32>}, {pipeline_mode = #tpu.pipeline_mode<synchronous>, transform_indices = @transform_1, window_bounds = array<i64: 32, 128>}, {transform_indices = @transform_2, window_bounds = array<i64: 256, 128>}]} {
    %c0 = arith.constant 0 : index
    %c0_0 = arith.constant 0 : index
    %0 = vector.load %arg1[%c0, %c0_0] : memref<256x32xf32, #tpu.memory_space<vmem>>, vector<256x32xf32>
    %c0_1 = arith.constant 0 : index
    %c0_2 = arith.constant 0 : index
    %1 = vector.load %arg2[%c0_1, %c0_2] : memref<32x128xf32, #tpu.memory_space<vmem>>, vector<32x128xf32>
    %cst = arith.constant dense<0.000000e+00> : vector<256x128xf32>
    %2 = tpu.matmul %0, %1, %cst {dimension_numbers = #tpu.dot_dimension_numbers<[1], [0], [0], [1], [0, 0, 1, 1], [], []>} : vector<256x32xf32>, vector<32x128xf32>, vector<256x128xf32> -> vector<256x128xf32>
    %c0_3 = arith.constant 0 : index
    %c0_4 = arith.constant 0 : index
    %3 = vector.load %arg3[%c0_3, %c0_4] : memref<256x128xf32, #tpu.memory_space<vmem>>, vector<256x128xf32>
    tpu.vector_store %arg3[%c0_3, %c0_4], %2 {strides = array<i32>} : memref<256x128xf32, #tpu.memory_space<vmem>>, vector<256x128xf32>,
    return
  }
  func.func @transform_0(%arg0: i32) -> (i32, i32) {
    %c0_i32 = arith.constant 0 : i32
    %c0_i32_0 = arith.constant 0 : i32
    return %arg0, %c0_i32 : i32, i32
  }
  func.func @transform_1(%arg0: i32) -> (i32, i32) {
    %c0_i32 = arith.constant 0 : i32
    %c0_i32_0 = arith.constant 0 : i32
    %c0_i32_1 = arith.constant 0 : i32
    return %c0_i32, %c0_i32_0 : i32, i32
  }
  func.func @transform_2(%arg0: i32) -> (i32, i32) {
    %c0_i32 = arith.constant 0 : i32
    %c0_i32_0 = arith.constant 0 : i32
    return %arg0, %c0_i32 : i32, i32
  }
}

</mosaic_0001>

<llo_original>
// kernel: tpu_custom_call.1
$region0: #{tpu_custom_call.1}
  #allocation0 [shape = 'u32[]', space=smem, size = 0x4, offset = 0x4, fixed_abs, tag = 'smem constant byte address 0x4 - core index']
  #allocation1 [shape = 'u32[72,128]{1,0:T(1,128)}', space=vmem, size = 0x9000, scoped, tag = 'internal scratch']
  %s0 = inlined_call_operand.vmem [shape: f32[256,32], index: 0, kind: input, shape index: {}]
  %s1 = inlined_call_operand.vmem [shape: f32[32,128], index: 1, kind: input, shape index: {}]
  %s2 = inlined_call_operand.hbm [shape: f32[256,128], index: 2, kind: output, shape index: {}]
  %s3 = sld [smem:[#allocation0]]
  $region18: #{tpu_custom_call.1} parent=0
    _
  %s5 = ssub.s32 1, %s3
  %s6 = scalar_select 0, %s5, %s3
  $region1: #{tpu_custom_call.1} parent=0
    #allocation2 [shape = 'u8[131072]{0}', space=vmem, size = 0x20000, scoped, tag = 'output window, operand 0, single buffered']
    #allocation3 [shape = 's32[1]{0}', space=sflag, size = 0x4, scoped, tag = 'scoped memory for tpu_custom_call.1']
    %7 = vsyncpa [#allocation3], 0
    // Predicated region
    $region2: #{tpu_custom_call.1} parent=1 // pred_check
      _
    $region3: #{tpu_custom_call.1} parent=1 // pred_check_branch
      %9 = sbr.rel (0) target = $region5
    $region4: #{tpu_custom_call.1} parent=1 // pred_region
      _
    $region5: #{tpu_custom_call.1} parent=1 // pred_fallthru
      _
    // Predicated region
    $region6: #{tpu_custom_call.1} parent=1 // pred_check
      _
    $region7: #{tpu_custom_call.1} parent=1 // pred_check_branch
      %11 = sbr.rel (0) target = $region9
    $region8: #{tpu_custom_call.1} parent=1 // pred_region
      _
    $region9: #{tpu_custom_call.1} parent=1 // pred_fallthru
      _
    %v12 = vld [vmem:[%s0] sm:$0xff]
    %v13 = vld [vmem:[%s0 + $0x8] sm:$0xff]
    %v14 = vld [vmem:[%s0 + $0x10] sm:$0xff]
    %v15 = vld [vmem:[%s0 + $0x18] sm:$0xff]
    %v16 = vld [vmem:[%s0 + $0x20] sm:$0xff]
    %v17 = vld [vmem:[%s0 + $0x28] sm:$0xff]
    %v18 = vld [vmem:[%s0 + $0x30] sm:$0xff]
    %v19 = vld [vmem:[%s0 + $0x38] sm:$0xff]
    %v20 = vld [vmem:[%s0 + $0x40] sm:$0xff]
    %v21 = vld [vmem:[%s0 + $0x48] sm:$0xff]
    %v22 = vld [vmem:[%s0 + $0x50] sm:$0xff]
    %v23 = vld [vmem:[%s0 + $0x58] sm:$0xff]
    %v24 = vld [vmem:[%s0 + $0x60] sm:$0xff]
    %v25 = vld [vmem:[%s0 + $0x68] sm:$0xff]
    %v26 = vld [vmem:[%s0 + $0x70] sm:$0xff]
    %v27 = vld [vmem:[%s0 + $0x78] sm:$0xff]
    %v28 = vld [vmem:[%s0 + $0x80] sm:$0xff]
    %v29 = vld [vmem:[%s0 + $0x88] sm:$0xff]
    %v30 = vld [vmem:[%s0 + $0x90] sm:$0xff]
    %v31 = vld [vmem:[%s0 + $0x98] sm:$0xff]
    %v32 = vld [vmem:[%s0 + $0xa0] sm:$0xff]
    %v33 = vld [vmem:[%s0 + $0xa8] sm:$0xff]
    %v34 = vld [vmem:[%s0 + $0xb0] sm:$0xff]
    %v35 = vld [vmem:[%s0 + $0xb8] sm:$0xff]
    %v36 = vld [vmem:[%s0 + $0xc0] sm:$0xff]
    %v37 = vld [vmem:[%s0 + $0xc8] sm:$0xff]
    %v38 = vld [vmem:[%s0 + $0xd0] sm:$0xff]
    %v39 = vld [vmem:[%s0 + $0xd8] sm:$0xff]
    %v40 = vld [vmem:[%s0 + $0xe0] sm:$0xff]
    %v41 = vld [vmem:[%s0 + $0xe8] sm:$0xff]
    %v42 = vld [vmem:[%s0 + $0xf0] sm:$0xff]
    %v43 = vld [vmem:[%s0 + $0xf8] sm:$0xff]
    %v44 = vld [vmem:[%s1] sm:$0xff]
    %v45 = vld [vmem:[%s1 + $0x8] sm:$0xff]
    %v46 = vld [vmem:[%s1 + $0x10] sm:$0xff]
    %v47 = vld [vmem:[%s1 + $0x18] sm:$0xff]
    %vm48 = vcmask 261120
    %v50 = vsel %vm48, %v12, 0
    %v53 = vsel %vm48, %v13, 0
    %v56 = vsel %vm48, %v14, 0
    %v59 = vsel %vm48, %v15, 0
    %v62 = vsel %vm48, %v16, 0
    %v65 = vsel %vm48, %v17, 0
    %v68 = vsel %vm48, %v18, 0
    %v71 = vsel %vm48, %v19, 0
    %v74 = vsel %vm48, %v20, 0
    %v77 = vsel %vm48, %v21, 0
    %v80 = vsel %vm48, %v22, 0
    %v83 = vsel %vm48, %v23, 0
    %v86 = vsel %vm48, %v24, 0
    %v89 = vsel %vm48, %v25, 0
    %v92 = vsel %vm48, %v26, 0
    %v95 = vsel %vm48, %v27, 0
    %v98 = vsel %vm48, %v28, 0
    %v101 = vsel %vm48, %v29, 0
    %v104 = vsel %vm48, %v30, 0
    %v107 = vsel %vm48, %v31, 0
    %v110 = vsel %vm48, %v32, 0
    %v113 = vsel %vm48, %v33, 0
    %v116 = vsel %vm48, %v34, 0
    %v119 = vsel %vm48, %v35, 0
    %v122 = vsel %vm48, %v36, 0
    %v125 = vsel %vm48, %v37, 0
    %v128 = vsel %vm48, %v38, 0
    %v131 = vsel %vm48, %v39, 0
    %v134 = vsel %vm48, %v40, 0
    %v137 = vsel %vm48, %v41, 0
    %v140 = vsel %vm48, %v42, 0
    %v143 = vsel %vm48, %v43, 0
    %145 = vmatpush.msra.mxu0 0.0
    %146 = vmatpush.msra.mxu0 0.0
    %147 = vmatpush.msra.mxu0 0.0
    %148 = vmatpush.msra.mxu0 0.0
    %149 = vmatpush.msra.mxu0 0.0
    %150 = vmatpush.msra.mxu0 0.0
    %151 = vmatpush.msra.mxu0 0.0
    %152 = vmatpush.msra.mxu0 0.0
    %153 = vmatpush.msra.mxu0 0.0
    %154 = vmatpush.msra.mxu0 0.0
    %155 = vmatpush.msra.mxu0 0.0
    %156 = vmatpush.msra.mxu0 0.0
    %157 = vmatpush.msra.mxu0 %v47
    %158 = vmatpush.msra.mxu0 %v46
    %159 = vmatpush.msra.mxu0 %v45
    %160 = vmatpush.msra.mxu0 %v44
    %161 = vmatmul.f32.gmra.mxu0 %v50
    %v162 = vpop.f32.mrf.mxu0
    %v163 = vadd.f32 0.0, %v162
    %164 = vmatmul.f32.gmra.mxu0 %v53
    %v165 = vpop.f32.mrf.mxu0
    %v166 = vadd.f32 0.0, %v165
    %167 = vmatmul.f32.gmra.mxu0 %v56
    %v168 = vpop.f32.mrf.mxu0
    %v169 = vadd.f32 0.0, %v168
    %170 = vmatmul.f32.gmra.mxu0 %v59
    %v171 = vpop.f32.mrf.mxu0
    %v172 = vadd.f32 0.0, %v171
    %173 = vmatmul.f32.gmra.mxu0 %v62
    %v174 = vpop.f32.mrf.mxu0
    %v175 = vadd.f32 0.0, %v174
    %176 = vmatmul.f32.gmra.mxu0 %v65
    %v177 = vpop.f32.mrf.mxu0
    %v178 = vadd.f32 0.0, %v177
    %179 = vmatmul.f32.gmra.mxu0 %v68
    %v180 = vpop.f32.mrf.mxu0
    %v181 = vadd.f32 0.0, %v180
    %182 = vmatmul.f32.gmra.mxu0 %v71
    %v183 = vpop.f32.mrf.mxu0
    %v184 = vadd.f32 0.0, %v183
    %185 = vmatmul.f32.gmra.mxu0 %v74
    %v186 = vpop.f32.mrf.mxu0
    %v187 = vadd.f32 0.0, %v186
    %188 = vmatmul.f32.gmra.mxu0 %v77
    %v189 = vpop.f32.mrf.mxu0
    %v190 = vadd.f32 0.0, %v189
    %191 = vmatmul.f32.gmra.mxu0 %v80
    %v192 = vpop.f32.mrf.mxu0
    %v193 = vadd.f32 0.0, %v192
    %194 = vmatmul.f32.gmra.mxu0 %v83
    %v195 = vpop.f32.mrf.mxu0
    %v196 = vadd.f32 0.0, %v195
    %197 = vmatmul.f32.gmra.mxu0 %v86
    %v198 = vpop.f32.mrf.mxu0
    %v199 = vadd.f32 0.0, %v198
    %200 = vmatmul.f32.gmra.mxu0 %v89
    %v201 = vpop.f32.mrf.mxu0
    %v202 = vadd.f32 0.0, %v201
    %203 = vmatmul.f32.gmra.mxu0 %v92
    %v204 = vpop.f32.mrf.mxu0
    %v205 = vadd.f32 0.0, %v204
    %206 = vmatmul.f32.gmra.mxu0 %v95
    %v207 = vpop.f32.mrf.mxu0
    %v208 = vadd.f32 0.0, %v207
    %209 = vmatmul.f32.gmra.mxu0 %v98
    %v210 = vpop.f32.mrf.mxu0
    %v211 = vadd.f32 0.0, %v210
    %212 = vmatmul.f32.gmra.mxu0 %v101
    %v213 = vpop.f32.mrf.mxu0
    %v214 = vadd.f32 0.0, %v213
    %215 = vmatmul.f32.gmra.mxu0 %v104
    %v216 = vpop.f32.mrf.mxu0
    %v217 = vadd.f32 0.0, %v216
    %218 = vmatmul.f32.gmra.mxu0 %v107
    %v219 = vpop.f32.mrf.mxu0
    %v220 = vadd.f32 0.0, %v219
    %221 = vmatmul.f32.gmra.mxu0 %v110
    %v222 = vpop.f32.mrf.mxu0
    %v223 = vadd.f32 0.0, %v222
    %224 = vmatmul.f32.gmra.mxu0 %v113
    %v225 = vpop.f32.mrf.mxu0
    %v226 = vadd.f32 0.0, %v225
    %227 = vmatmul.f32.gmra.mxu0 %v116
    %v228 = vpop.f32.mrf.mxu0
    %v229 = vadd.f32 0.0, %v228
    %230 = vmatmul.f32.gmra.mxu0 %v119
    %v231 = vpop.f32.mrf.mxu0
    %v232 = vadd.f32 0.0, %v231
    %233 = vmatmul.f32.gmra.mxu0 %v122
    %v234 = vpop.f32.mrf.mxu0
    %v235 = vadd.f32 0.0, %v234
    %236 = vmatmul.f32.gmra.mxu0 %v125
    %v237 = vpop.f32.mrf.mxu0
    %v238 = vadd.f32 0.0, %v237
    %239 = vmatmul.f32.gmra.mxu0 %v128
    %v240 = vpop.f32.mrf.mxu0
    %v241 = vadd.f32 0.0, %v240
    %242 = vmatmul.f32.gmra.mxu0 %v131
    %v243 = vpop.f32.mrf.mxu0
    %v244 = vadd.f32 0.0, %v243
    %245 = vmatmul.f32.gmra.mxu0 %v134
    %v246 = vpop.f32.mrf.mxu0
    %v247 = vadd.f32 0.0, %v246
    %248 = vmatmul.f32.gmra.mxu0 %v137
    %v249 = vpop.f32.mrf.mxu0
    %v250 = vadd.f32 0.0, %v249
    %251 = vmatmul.f32.gmra.mxu0 %v140
    %v252 = vpop.f32.mrf.mxu0
    %v253 = vadd.f32 0.0, %v252
    %254 = vmatmul.f32.gmra.mxu0 %v143
    %v255 = vpop.f32.mrf.mxu0
    %v256 = vadd.f32 0.0, %v255
    %257 = vdwg.mxu0
    %258 = vst [vmem:[#allocation2] sm:$0xff] %v163
    %259 = vst [vmem:[#allocation2 + $0x8] sm:$0xff] %v166
    %260 = vst [vmem:[#allocation2 + $0x10] sm:$0xff] %v169
    %261 = vst [vmem:[#allocation2 + $0x18] sm:$0xff] %v172
    %262 = vst [vmem:[#allocation2 + $0x20] sm:$0xff] %v175
    %263 = vst [vmem:[#allocation2 + $0x28] sm:$0xff] %v178
    %264 = vst [vmem:[#allocation2 + $0x30] sm:$0xff] %v181
    %265 = vst [vmem:[#allocation2 + $0x38] sm:$0xff] %v184
    %266 = vst [vmem:[#allocation2 + $0x40] sm:$0xff] %v187
    %267 = vst [vmem:[#allocation2 + $0x48] sm:$0xff] %v190
    %268 = vst [vmem:[#allocation2 + $0x50] sm:$0xff] %v193
    %269 = vst [vmem:[#allocation2 + $0x58] sm:$0xff] %v196
    %270 = vst [vmem:[#allocation2 + $0x60] sm:$0xff] %v199
    %271 = vst [vmem:[#allocation2 + $0x68] sm:$0xff] %v202
    %272 = vst [vmem:[#allocation2 + $0x70] sm:$0xff] %v205
    %273 = vst [vmem:[#allocation2 + $0x78] sm:$0xff] %v208
    %274 = vst [vmem:[#allocation2 + $0x80] sm:$0xff] %v211
    %275 = vst [vmem:[#allocation2 + $0x88] sm:$0xff] %v214
    %276 = vst [vmem:[#allocation2 + $0x90] sm:$0xff] %v217
    %277 = vst [vmem:[#allocation2 + $0x98] sm:$0xff] %v220
    %278 = vst [vmem:[#allocation2 + $0xa0] sm:$0xff] %v223
    %279 = vst [vmem:[#allocation2 + $0xa8] sm:$0xff] %v226
    %280 = vst [vmem:[#allocation2 + $0xb0] sm:$0xff] %v229
    %281 = vst [vmem:[#allocation2 + $0xb8] sm:$0xff] %v232
    %282 = vst [vmem:[#allocation2 + $0xc0] sm:$0xff] %v235
    %283 = vst [vmem:[#allocation2 + $0xc8] sm:$0xff] %v238
    %284 = vst [vmem:[#allocation2 + $0xd0] sm:$0xff] %v241
    %285 = vst [vmem:[#allocation2 + $0xd8] sm:$0xff] %v244
    %286 = vst [vmem:[#allocation2 + $0xe0] sm:$0xff] %v247
    %287 = vst [vmem:[#allocation2 + $0xe8] sm:$0xff] %v250
    %288 = vst [vmem:[#allocation2 + $0xf0] sm:$0xff] %v253
    %289 = vst [vmem:[#allocation2 + $0xf8] sm:$0xff] %v256
    // Predicated region
    $region10: #{tpu_custom_call.1} parent=1 // pred_check
      _
    $region11: #{tpu_custom_call.1} parent=1 // pred_check_branch
      %291 = sbr.rel (0) target = $region13
    $region12: #{tpu_custom_call.1} parent=1 // pred_region
      %293 = vsyncadd [#allocation3], 0
      %s294 = sshll.u32 [#allocation2], 4
      %s295 = int_to_ptr.vmem [resolvable:$true] %s294
      %s296 = sshll.u32 %s2, 4
      %s297 = int_to_ptr.hbm [resolvable:$true] %s296
      %302 = dma.vmem_to_hbm [thread:$0]  %s295, 4096, %s297, [#allocation3], 128, 128, 8
    $region13: #{tpu_custom_call.1} parent=1 // pred_fallthru
      _
    // Predicated region
    $region14: #{tpu_custom_call.1} parent=1 // pred_check
      _
    $region15: #{tpu_custom_call.1} parent=1 // pred_check_branch
      %304 = sbr.rel (0) target = $region17
    $region16: #{tpu_custom_call.1} parent=1 // pred_region
      %306 = dma.done [#allocation3], 4096
    $region17: #{tpu_custom_call.1} parent=1 // pred_fallthru
      _
    %307 = vsyncpa [#allocation3], 1

</llo_original>
